<compile_context>
chip_gen: v6e
topology: v6e:2x2x1
jax: 0.10.0
libtpu: 0.0.40
codegen_flags: <defaults>
</compile_context>

<pallas_src>
import jax
import jax.numpy as jnp
from jax.experimental import pallas as pl
from jax.experimental.pallas import tpu as pltpu

MAX_DEGREE = 4


def scale_degree_kernel(exp_scale_ref, deg_ref, x_ref, o_ref):
    # exp_scale_ref: (MAX_DEGREE, W) f32 -- same (resident) block every step
    # deg_ref:       (tn, 1) int32
    # x_ref/o_ref:   (tn, W) in x's dtype
    deg = deg_ref[...]                                   # (tn, 1)
    rows = deg.shape[0]

    # One-hot over the tiny static degree axis; the 4-row "gather" runs on the
    # otherwise-idle MXU (K = MAX_DEGREE), leaving ~1 VPU op per element.
    iota = jax.lax.broadcasted_iota(jnp.int32, (rows, MAX_DEGREE), 1)
    onehot = (iota == deg).astype(jnp.float32)           # (tn, MAX_DEGREE)
    gathered = jnp.dot(onehot, exp_scale_ref[...],
                       preferred_element_type=jnp.float32)  # (tn, W) f32

    # Keep the scale math in f32; only the product is cast to the output dtype.
    o_ref[...] = (gathered * x_ref[...].astype(jnp.float32)).astype(o_ref.dtype)


def _round_up(a, b):
    return ((a + b - 1) // b) * b


def scale_degree_layer(x, deg, scale, *, tn=None):
    """exp(scale)[deg] * x   (Pallas TPU kernel)."""
    N, W = x.shape
    assert scale.shape == (MAX_DEGREE, W)

    itemsize = jnp.dtype(x.dtype).itemsize
    w_lane = _round_up(W, 128)  # lane-padded width (VMEM layout) -- budgeting only

    if tn is None:
        # ~4 MiB of x per grid step (halves the fixed ~0.35us/step overhead
        # fraction on v7x's 3.2 TB/s HBM; ~1-3% win on v6e; neutral on v5e).
        tn = (4 * 1024 * 1024) // max(1, w_lane * itemsize)
        tn = min(tn, 4096)
        if N > 32:
            # >= 4 total grid steps so each v7x TensorCore gets >= 2 steps
            # (double-buffered streaming instead of fully exposed DMA).
            tn = min(tn, -(-N // 4))
        tn = min(tn, _round_up(N, 8))   # don't allocate VMEM past the data
        tn = max(8, (tn // 8) * 8)
    assert tn % 8 == 0

    grid = (pl.cdiv(N, tn),)  # partial final block instead of padding N

    # VMEM footprint (double-buffered), incl. the deg tile's 128-lane padding
    # and the resident exp(scale) block.  Only v5e (16 MiB default scoped)
    # needs an explicit bump; the cap stays safe on every generation.
    blk_x = tn * w_lane * itemsize
    blk_o = tn * w_lane * itemsize
    blk_deg = tn * 128 * 4
    blk_scale = _round_up(MAX_DEGREE, 8) * w_lane * 4
    footprint = 2 * (blk_x + blk_o + blk_deg + blk_scale)
    cp_kwargs = dict(dimension_semantics=("parallel",))
    if footprint > (14 << 20):
        cp_kwargs["vmem_limit_bytes"] = int(min(footprint + (4 << 20), 32 << 20))

    # exp(scale) once, outside the kernel (tiny (MAX_DEGREE, W) op), kept f32.
    exp_scale = jnp.exp(scale.astype(jnp.float32))
    deg2 = deg.reshape(N, 1).astype(jnp.int32)

    cost = pl.CostEstimate(
        flops=int(N) * int(W) * (2 * MAX_DEGREE + 1),
        transcendentals=0,
        bytes_accessed=2 * int(N) * int(W) * itemsize + int(N) * 4
        + MAX_DEGREE * int(W) * 4,
    )

    out = pl.pallas_call(
        scale_degree_kernel,
        out_shape=jax.ShapeDtypeStruct((N, W), x.dtype),
        grid_spec=pltpu.PrefetchScalarGridSpec(
            num_scalar_prefetch=0,
            grid=grid,
            in_specs=[
                pl.BlockSpec((MAX_DEGREE, W), lambda i: (0, 0)),  # exp(scale), resident
                pl.BlockSpec((tn, 1), lambda i: (i, 0)),          # deg tile
                pl.BlockSpec((tn, W), lambda i: (i, 0)),          # x tile (full W)
            ],
            out_specs=pl.BlockSpec((tn, W), lambda i: (i, 0)),
        ),
        compiler_params=pltpu.CompilerParams(**cp_kwargs),
        cost_estimate=cost,
    )(exp_scale, deg2, x)

    return out


if __name__ == "__main__":
    key = jax.random.PRNGKey(0)
    kx, kd = jax.random.split(key)

    # Small shapes; deliberately not multiples of (8, 128) to exercise the
    # partial-last-block / full-width (no padding) paths.
    width = 96
    N = 12
    scale_init = 0.5

    # Deterministic parameter init, same as the module's __init__:
    # zeros(MAX_DEGREE, width) + log(scale_init)
    scale = jnp.zeros((MAX_DEGREE, width), jnp.float32) + jnp.log(scale_init)

    x = jax.random.normal(kx, (N, width), dtype=jnp.float32)
    deg = jax.random.randint(kd, (N,), 0, MAX_DEGREE, dtype=jnp.int32)

    out = scale_degree_layer(x, deg, scale)
    out = jax.block_until_ready(out)

    # Pure-JAX reference
    ref = jnp.exp(scale)[deg] * x
    assert out.shape == ref.shape
    assert jnp.allclose(out, ref, atol=1e-5, rtol=1e-5)

    print("KERNEL_OK")
</pallas_src>

<mosaic_0001>
module attributes {stable_mosaic.version = 11 : i64} {
  func.func @scale_degree_kernel(%arg0: i32, %arg1: memref<4x96xf32, #tpu.memory_space<vmem>>, %arg2: memref<16x1xi32, #tpu.memory_space<vmem>>, %arg3: memref<16x96xf32, #tpu.memory_space<vmem>>, %arg4: memref<16x96xf32, #tpu.memory_space<vmem>>) attributes {dimension_semantics = [#tpu.dimension_semantics<parallel>], iteration_bounds = array<i64: 1>, scalar_prefetch = 0 : i64, scratch_operands = 0 : i64, tpu.core_type = #tpu.core_type<tc>, window_params = [{pipeline_mode = #tpu.pipeline_mode<synchronous>, transform_indices = @transform_0, window_bounds = array<i64: 4, 96>}, {transform_indices = @transform_1, window_bounds = array<i64: 16, 1>}, {transform_indices = @transform_2, window_bounds = array<i64: 16, 96>}, {transform_indices = @transform_3, window_bounds = array<i64: 16, 96>}]} {
    %c0 = arith.constant 0 : index
    %c0_0 = arith.constant 0 : index
    %0 = vector.load %arg2[%c0, %c0_0] : memref<16x1xi32, #tpu.memory_space<vmem>>, vector<16x1xi32>
    %1 = tpu.iota {dimensions = array<i32: 1>} : vector<16x4xi32>
    %2 = vector.broadcast %0 : vector<16x1xi32> to vector<16x4xi32>
    %3 = arith.cmpi eq, %1, %2 : vector<16x4xi32>
    %4 = arith.extui %3 : vector<16x4xi1> to vector<16x4xi32>
    %5 = arith.sitofp %4 : vector<16x4xi32> to vector<16x4xf32>
    %c0_1 = arith.constant 0 : index
    %c0_2 = arith.constant 0 : index
    %6 = vector.load %arg1[%c0_1, %c0_2] : memref<4x96xf32, #tpu.memory_space<vmem>>, vector<4x96xf32>
    %cst = arith.constant dense<0.000000e+00> : vector<16x96xf32>
    %7 = tpu.matmul %5, %6, %cst {dimension_numbers = #tpu.dot_dimension_numbers<[1], [0], [0], [1], [0, 0, 1, 1], [], []>} : vector<16x4xf32>, vector<4x96xf32>, vector<16x96xf32> -> vector<16x96xf32>
    %c0_3 = arith.constant 0 : index
    %c0_4 = arith.constant 0 : index
    %8 = vector.load %arg3[%c0_3, %c0_4] : memref<16x96xf32, #tpu.memory_space<vmem>>, vector<16x96xf32>
    %9 = arith.mulf %7, %8 : vector<16x96xf32>
    %c0_5 = arith.constant 0 : index
    %c0_6 = arith.constant 0 : index
    %10 = vector.load %arg4[%c0_5, %c0_6] : memref<16x96xf32, #tpu.memory_space<vmem>>, vector<16x96xf32>
    tpu.vector_store %arg4[%c0_5, %c0_6], %9 {strides = array<i32>} : memref<16x96xf32, #tpu.memory_space<vmem>>, vector<16x96xf32>,
    return
  }
  func.func @transform_0(%arg0: i32) -> (i32, i32) {
    %c0_i32 = arith.constant 0 : i32
    %c0_i32_0 = arith.constant 0 : i32
    %c0_i32_1 = arith.constant 0 : i32
    return %c0_i32, %c0_i32_0 : i32, i32
  }
  func.func @transform_1(%arg0: i32) -> (i32, i32) {
    %c0_i32 = arith.constant 0 : i32
    %c0_i32_0 = arith.constant 0 : i32
    return %arg0, %c0_i32 : i32, i32
  }
  func.func @transform_2(%arg0: i32) -> (i32, i32) {
    %c0_i32 = arith.constant 0 : i32
    %c0_i32_0 = arith.constant 0 : i32
    return %arg0, %c0_i32 : i32, i32
  }
  func.func @transform_3(%arg0: i32) -> (i32, i32) {
    %c0_i32 = arith.constant 0 : i32
    %c0_i32_0 = arith.constant 0 : i32
    return %arg0, %c0_i32 : i32, i32
  }
}

</mosaic_0001>

<llo_original>
// kernel: tpu_custom_call.1
$region0: #{tpu_custom_call.1}
  #allocation0 [shape = 'u32[]', space=smem, size = 0x4, offset = 0x4, fixed_abs, tag = 'smem constant byte address 0x4 - core index']
  #allocation1 [shape = 'u32[144,128]{1,0:T(1,128)}', space=vmem, size = 0x12000, scoped, tag = 'internal scratch']
  %s0 = inlined_call_operand.vmem [shape: f32[4,96], index: 0, kind: input, shape index: {}]
  %s1 = inlined_call_operand.vmem [shape: s32[12,1], index: 1, kind: input, shape index: {}]
  %s2 = inlined_call_operand.vmem [shape: f32[12,96], index: 2, kind: input, shape index: {}]
  %s3 = inlined_call_operand.hbm [shape: f32[12,96], index: 3, kind: output, shape index: {}]
  %s4 = sld [smem:[#allocation0]]
  $region22: #{tpu_custom_call.1} parent=0
    _
  %s6 = ssub.s32 1, %s4
  %s7 = scalar_select 0, %s6, %s4
  $region1: #{tpu_custom_call.1} parent=0
    #allocation2 [shape = 'u8[8192]{0}', space=vmem, size = 0x2000, scoped, tag = 'output window, operand 0, single buffered']
    #allocation3 [shape = 's32[1]{0}', space=sflag, size = 0x4, scoped, tag = 'scoped memory for tpu_custom_call.1']
    %8 = vsyncpa [#allocation3], 0
    // Predicated region
    $region2: #{tpu_custom_call.1} parent=1 // pred_check
      _
    $region3: #{tpu_custom_call.1} parent=1 // pred_check_branch
      %10 = sbr.rel (0) target = $region5
    $region4: #{tpu_custom_call.1} parent=1 // pred_region
      _
    $region5: #{tpu_custom_call.1} parent=1 // pred_fallthru
      _
    // Predicated region
    $region6: #{tpu_custom_call.1} parent=1 // pred_check
      _
    $region7: #{tpu_custom_call.1} parent=1 // pred_check_branch
      %12 = sbr.rel (0) target = $region9
    $region8: #{tpu_custom_call.1} parent=1 // pred_region
      _
    $region9: #{tpu_custom_call.1} parent=1 // pred_fallthru
      _
    // Predicated region
    $region10: #{tpu_custom_call.1} parent=1 // pred_check
      _
    $region11: #{tpu_custom_call.1} parent=1 // pred_check_branch
      %14 = sbr.rel (0) target = $region13
    $region12: #{tpu_custom_call.1} parent=1 // pred_region
      _
    $region13: #{tpu_custom_call.1} parent=1 // pred_fallthru
      _
    %v15 = vld [vmem:[%s1] sm:$0xff]
    %v16 = vld [vmem:[%s1 + $0x8] sm:$0xff]
    %v17 = vlaneseq
    %v18 = vand.u32 %v17, 127
    %19 = vset.pattern.permute.xlu0 0
    %20 = vperm.xlu0 %19, %v15
    %v21 = vpop.permute.xlu0 %20
    %22 = vset.pattern.permute.xlu0 0
    %23 = vperm.xlu0 %22, %v16
    %v24 = vpop.permute.xlu0 %23
    %vm25 = vcmp.eq.s32.totalorder %v18, %v21
    %vm26 = vcmp.eq.s32.totalorder %v18, %v24
    %v27 = vsel %vm25, 1, 0
    %v28 = vsel %vm26, 1, 0
    %v29 = vcvt.s32.f32 %v27
    %v30 = vcvt.s32.f32 %v28
    %v31 = vld [vmem:[%s0] sm:$0xf]
    %vm32 = vcmask 31744
    %v34 = vsel %vm32, %v29, 0
    %v37 = vsel %vm32, %v30, 0
    %vm39 = vcmask 1043456
    %v41 = vsel %vm39, %v31, 0
    %43 = vmatprep.subr.mxu0 0.0
    %44 = vmatpush1.msra.mxu0 0.0
    %45 = vmatprep.subr.mxu0 0.0
    %46 = vmatpush1.msra.mxu0 0.0
    %47 = vmatprep.subr.mxu0 0.0
    %48 = vmatpush1.msra.mxu0 0.0
    %49 = vmatprep.subr.mxu0 0.0
    %50 = vmatpush1.msra.mxu0 0.0
    %51 = vmatprep.subr.mxu0 0.0
    %52 = vmatpush1.msra.mxu0 0.0
    %53 = vmatprep.subr.mxu0 0.0
    %54 = vmatpush1.msra.mxu0 0.0
    %55 = vmatprep.subr.mxu0 0.0
    %56 = vmatpush1.msra.mxu0 0.0
    %57 = vmatprep.subr.mxu0 0.0
    %58 = vmatpush1.msra.mxu0 0.0
    %59 = vmatprep.subr.mxu0 0.0
    %60 = vmatpush1.msra.mxu0 0.0
    %61 = vmatprep.subr.mxu0 0.0
    %62 = vmatpush1.msra.mxu0 0.0
    %63 = vmatprep.subr.mxu0 0.0
    %64 = vmatpush1.msra.mxu0 0.0
    %65 = vmatprep.subr.mxu0 0.0
    %66 = vmatpush1.msra.mxu0 0.0
    %67 = vmatprep.subr.mxu0 0.0
    %68 = vmatpush1.msra.mxu0 0.0
    %69 = vmatprep.subr.mxu0 0.0
    %70 = vmatpush1.msra.mxu0 0.0
    %71 = vmatprep.subr.mxu0 0.0
    %72 = vmatpush1.msra.mxu0 0.0
    %73 = vmatprep.subr.mxu0 0.0
    %74 = vmatpush1.msra.mxu0 %v41
    %75 = vmatprep.subr.mxu0 0.0
    %76 = vmatpush2.msra.mxu0 0.0
    %77 = vmatprep.subr.mxu0 0.0
    %78 = vmatpush2.msra.mxu0 0.0
    %79 = vmatprep.subr.mxu0 0.0
    %80 = vmatpush2.msra.mxu0 0.0
    %81 = vmatprep.subr.mxu0 0.0
    %82 = vmatpush2.msra.mxu0 0.0
    %83 = vmatprep.subr.mxu0 0.0
    %84 = vmatpush2.msra.mxu0 0.0
    %85 = vmatprep.subr.mxu0 0.0
    %86 = vmatpush2.msra.mxu0 0.0
    %87 = vmatprep.subr.mxu0 0.0
    %88 = vmatpush2.msra.mxu0 0.0
    %89 = vmatprep.subr.mxu0 0.0
    %90 = vmatpush2.msra.mxu0 0.0
    %91 = vmatprep.subr.mxu0 0.0
    %92 = vmatpush2.msra.mxu0 0.0
    %93 = vmatprep.subr.mxu0 0.0
    %94 = vmatpush2.msra.mxu0 0.0
    %95 = vmatprep.subr.mxu0 0.0
    %96 = vmatpush2.msra.mxu0 0.0
    %97 = vmatprep.subr.mxu0 0.0
    %98 = vmatpush2.msra.mxu0 0.0
    %99 = vmatprep.subr.mxu0 0.0
    %100 = vmatpush2.msra.mxu0 0.0
    %101 = vmatprep.subr.mxu0 0.0
    %102 = vmatpush2.msra.mxu0 0.0
    %103 = vmatprep.subr.mxu0 0.0
    %104 = vmatpush2.msra.mxu0 0.0
    %105 = vmatprep.subr.mxu0 0.0
    %106 = vmatpush2.msra.mxu0 0.0
    %107 = vmatprep.mubr.f32.mxu0 0.0
    %108 = vmatmul.mubr.f32.gmra.mxu0 %v34
    %v109 = vpop.f32.mrf.mxu0
    %v110 = vadd.f32 0.0, %v109
    %v111 = vpop.f32.mrf.mxu0
    %112 = vmatprep.mubr.f32.mxu0 0.0
    %113 = vmatmul.mubr.f32.gmra.mxu0 %v37
    %v114 = vpop.f32.mrf.mxu0
    %v115 = vadd.f32 0.0, %v114
    %v116 = vpop.f32.mrf.mxu0
    %117 = vdwg.mxu0
    %v118 = vld [vmem:[%s2] sm:$0xff]
    %v119 = vld [vmem:[%s2 + $0x8] sm:$0xff]
    %v120 = vmul.f32 %v110, %v118
    %v121 = vmul.f32 %v115, %v119
    %vm122 = vcmask 785408
    %123 = vst.msk [vmem:[#allocation2] sm:$0xff] %vm122, %v120
    %124 = vst.msk [vmem:[#allocation2 + $0x8] sm:$0xff] %vm122, %v121
    // Predicated region
    $region14: #{tpu_custom_call.1} parent=1 // pred_check
      _
    $region15: #{tpu_custom_call.1} parent=1 // pred_check_branch
      %126 = sbr.rel (0) target = $region17
    $region16: #{tpu_custom_call.1} parent=1 // pred_region
      %s128 = ssub.s32 256, 256
      %129 = vsyncadd [#allocation3], %s128
      %s130 = sshll.u32 [#allocation2], 4
      %s131 = int_to_ptr.vmem [resolvable:$true] %s130
      %136 = dma.vmem_to_hbm [thread:$0]  %s131, 256, %s3, [#allocation3], 128, 128, 8
    $region17: #{tpu_custom_call.1} parent=1 // pred_fallthru
      _
    // Predicated region
    $region18: #{tpu_custom_call.1} parent=1 // pred_check
      _
    $region19: #{tpu_custom_call.1} parent=1 // pred_check_branch
      %138 = sbr.rel (0) target = $region21
    $region20: #{tpu_custom_call.1} parent=1 // pred_region
      %139 = dma.done [#allocation3], 256
    $region21: #{tpu_custom_call.1} parent=1 // pred_fallthru
      _
    %140 = vsyncpa [#allocation3], 1

</llo_original>
